<compile_context>
chip_gen: v7x
topology: tpu7x:2x2x1
jax: 0.10.0
libtpu: 0.0.40
codegen_flags: <defaults>
</compile_context>

<pallas_src>
import jax
import jax.numpy as jnp
from jax.experimental import pallas as pl
from jax.experimental.pallas import tpu as pltpu

BN_EPS = 1e-5
VMEM_LIMIT_BYTES = 32 * 1024 * 1024  # safe scoped-VMEM budget on v5e/v6e/v7x


def _round_up(x, m):
    return ((x + m - 1) // m) * m


# -------- Pass 1: conv tile -> per-channel sum / sum-of-squares accumulators --------
def _stats_kernel(p_ref, w_ref, sum_ref, sq_ref):
    @pl.when(pl.program_id(0) == 0)
    def _():
        sum_ref[...] = jnp.zeros_like(sum_ref)
        sq_ref[...] = jnp.zeros_like(sq_ref)

    conv = jnp.dot(p_ref[...], w_ref[...], preferred_element_type=jnp.float32)
    sum_ref[...] += jnp.sum(conv, axis=0, keepdims=True)
    sq_ref[...] += jnp.sum(conv * conv, axis=0, keepdims=True)


# -------- Pass 2: recompute conv tile, fused BN affine (scale/shift) + ReLU --------
def _norm_kernel(p_ref, w_ref, scale_ref, shift_ref, o_ref):
    conv = jnp.dot(p_ref[...], w_ref[...], preferred_element_type=jnp.float32)
    o_ref[...] = jnp.maximum(conv * scale_ref[...] + shift_ref[...], 0.0)


def _im2col(x, ksize, stride):
    # x: (N, Cin, H, W) -> patches (N*Ho*Wo, Cin*ksize*ksize) with (c, kh, kw)
    # flattening order, matching PyTorch's weight.reshape(Cout, Cin*kh*kw).
    N, C, H, W = x.shape
    Ho = (H - ksize) // stride + 1
    Wo = (W - ksize) // stride + 1
    cols = []
    for i in range(ksize):
        for j in range(ksize):
            patch = x[:, :, i:i + stride * Ho:stride, j:j + stride * Wo:stride]
            cols.append(patch)  # (N, C, Ho, Wo)
    cols = jnp.stack(cols, axis=2)                       # (N, C, k*k, Ho, Wo)
    cols = cols.transpose(0, 3, 4, 1, 2)                 # (N, Ho, Wo, C, k*k)
    cols = cols.reshape(N * Ho * Wo, C * ksize * ksize)  # (M, K)
    return cols, Ho, Wo


def block_forward(x, conv_w, conv_b, bn_gamma, bn_beta, *, ksize, stride,
                  compute_dtype=jnp.float32, tm=512):
    """x: (N, Cin, H, W) float32 -> (N, Cout, Ho, Wo) float32.

    conv_b is accepted for API parity with nn.Conv2d but unused: a conv bias
    immediately followed by training-mode BatchNorm is exactly cancelled by
    the batch-mean subtraction, so adding it is wasted VPU work.
    """
    del conv_b  # mathematically cancelled by BN mean subtraction
    N, Cin, H, W = x.shape
    Cout = conv_w.shape[0]

    patches, Ho, Wo = _im2col(x.astype(jnp.float32), ksize, stride)  # (M, K)
    M, K = patches.shape

    Kpad = _round_up(K, 128)      # lane/MXU-friendly contraction dim
    Cpad = _round_up(Cout, 128)   # lane-dense output stores (no masked vst)
    tm = _round_up(min(tm, max(M, 8)), 8)
    Mpad = _round_up(M, tm)
    n_tiles = Mpad // tm

    # Zero padding -> padded rows/cols contribute exactly 0 to conv/sum/sumsq,
    # so dividing by the true M below gives exact batch statistics.
    patches_p = jnp.zeros((Mpad, Kpad), compute_dtype).at[:M, :K].set(
        patches.astype(compute_dtype))
    w_t = conv_w.reshape(Cout, K).T.astype(compute_dtype)            # (K, Cout)
    w_p = jnp.zeros((Kpad, Cpad), compute_dtype).at[:K, :Cout].set(w_t)

    itemsize = jnp.dtype(compute_dtype).itemsize
    mm_flops = 2 * Mpad * Kpad * Cpad

    # ---------------- pass 1: batch statistics ----------------
    sums, sqs = pl.pallas_call(
        _stats_kernel,
        out_shape=(jax.ShapeDtypeStruct((1, Cpad), jnp.float32),
                   jax.ShapeDtypeStruct((1, Cpad), jnp.float32)),
        grid_spec=pltpu.PrefetchScalarGridSpec(
            num_scalar_prefetch=0,
            grid=(n_tiles,),
            in_specs=[pl.BlockSpec((tm, Kpad), lambda i: (i, 0)),
                      pl.BlockSpec((Kpad, Cpad), lambda i: (0, 0))],
            out_specs=[pl.BlockSpec((1, Cpad), lambda i: (0, 0)),
                       pl.BlockSpec((1, Cpad), lambda i: (0, 0))]),
        compiler_params=pltpu.CompilerParams(
            dimension_semantics=("arbitrary",),   # accumulators carried across M tiles
            vmem_limit_bytes=VMEM_LIMIT_BYTES),
        cost_estimate=pl.CostEstimate(
            flops=mm_flops + 3 * Mpad * Cpad,
            transcendentals=0,
            bytes_accessed=(Mpad * Kpad + Kpad * Cpad) * itemsize + 2 * Cpad * 4),
    )(patches_p, w_p)

    # Tiny per-channel epilogue in plain JAX: fold BN into one scale/shift.
    mean = sums[0, :Cout] / M
    var = jnp.maximum(sqs[0, :Cout] / M - mean * mean, 0.0)  # biased var (PyTorch fwd)
    inv_std = jax.lax.rsqrt(var + BN_EPS)
    scale = bn_gamma.astype(jnp.float32) * inv_std
    shift = bn_beta.astype(jnp.float32) - mean * scale
    scale_p = jnp.zeros((1, Cpad), jnp.float32).at[0, :Cout].set(scale)
    shift_p = jnp.zeros((1, Cpad), jnp.float32).at[0, :Cout].set(shift)

    # ---------------- pass 2: normalize + ReLU ----------------
    out_p = pl.pallas_call(
        _norm_kernel,
        out_shape=jax.ShapeDtypeStruct((Mpad, Cpad), jnp.float32),
        grid_spec=pltpu.PrefetchScalarGridSpec(
            num_scalar_prefetch=0,
            grid=(n_tiles,),
            in_specs=[pl.BlockSpec((tm, Kpad), lambda i: (i, 0)),
                      pl.BlockSpec((Kpad, Cpad), lambda i: (0, 0)),
                      pl.BlockSpec((1, Cpad), lambda i: (0, 0)),
                      pl.BlockSpec((1, Cpad), lambda i: (0, 0))],
            out_specs=pl.BlockSpec((tm, Cpad), lambda i: (i, 0))),
        compiler_params=pltpu.CompilerParams(
            dimension_semantics=("parallel",),    # independent tiles; megacore-shardable
            vmem_limit_bytes=VMEM_LIMIT_BYTES),
        cost_estimate=pl.CostEstimate(
            flops=mm_flops + 3 * Mpad * Cpad,
            transcendentals=0,
            bytes_accessed=(Mpad * Kpad + Kpad * Cpad) * itemsize
                           + (Mpad * Cpad + 2 * Cpad) * 4),
    )(patches_p, w_p, scale_p, shift_p)

    out = out_p[:M, :Cout]
    # NHWC rows -> NCHW to match the PyTorch module's output layout exactly.
    # (Could be dropped if downstream consumes NHWC; costs one output round trip.)
    return out.reshape(N, Ho, Wo, Cout).transpose(0, 3, 1, 2)


def _reference(x, conv_w, conv_b, bn_gamma, bn_beta, *, ksize, stride):
    # Pure-JAX reference (includes the conv bias; it cancels through BN).
    N = x.shape[0]
    Cout = conv_w.shape[0]
    patches, Ho, Wo = _im2col(x, ksize, stride)
    conv = patches @ conv_w.reshape(Cout, -1).T + conv_b[None, :]
    mean = conv.mean(axis=0, keepdims=True)
    var = conv.var(axis=0, keepdims=True)  # biased
    y = (conv - mean) / jnp.sqrt(var + BN_EPS) * bn_gamma[None, :] + bn_beta[None, :]
    y = jnp.maximum(y, 0.0)
    return y.reshape(N, Ho, Wo, Cout).transpose(0, 3, 1, 2)


if __name__ == "__main__":
    # Small shapes consistent with the module.
    N, Cin, H, W = 2, 4, 16, 16
    Cout, ksize, stride = 8, 3, 1

    key = jax.random.PRNGKey(0)
    kx, kw, kb, kg, kbeta = jax.random.split(key, 5)

    x = jax.random.normal(kx, (N, Cin, H, W), dtype=jnp.float32)
    conv_w = 0.1 * jax.random.normal(kw, (Cout, Cin, ksize, ksize), dtype=jnp.float32)
    conv_b = 0.1 * jax.random.normal(kb, (Cout,), dtype=jnp.float32)
    bn_gamma = 1.0 + 0.1 * jax.random.normal(kg, (Cout,), dtype=jnp.float32)
    bn_beta = 0.1 * jax.random.normal(kbeta, (Cout,), dtype=jnp.float32)

    ref = _reference(x, conv_w, conv_b, bn_gamma, bn_beta, ksize=ksize, stride=stride)

    # f32 path: matches PyTorch semantics tightly.
    out = block_forward(x, conv_w, conv_b, bn_gamma, bn_beta,
                        ksize=ksize, stride=stride)
    out = jax.block_until_ready(out)
    assert out.shape == (N, Cout, (H - ksize) // stride + 1, (W - ksize) // stride + 1)
    assert jnp.allclose(out, ref, atol=1e-4, rtol=1e-4)

    # bf16-MXU path (f32 accumulation) for v6e/v7x throughput; looser tolerance.
    out_bf16 = block_forward(x, conv_w, conv_b, bn_gamma, bn_beta,
                             ksize=ksize, stride=stride,
                             compute_dtype=jnp.bfloat16)
    out_bf16 = jax.block_until_ready(out_bf16)
    assert jnp.all(jnp.isfinite(out_bf16))
    assert jnp.allclose(out_bf16, ref, atol=0.15, rtol=0.15)

    print("KERNEL_OK")
</pallas_src>

<mosaic_0001>
module attributes {stable_mosaic.version = 11 : i64} {
  func.func @_stats_kernel(%arg0: i32, %arg1: memref<392x128xf32, #tpu.memory_space<vmem>>, %arg2: memref<128x128xf32, #tpu.memory_space<vmem>>, %arg3: memref<1x128xf32, #tpu.memory_space<vmem>>, %arg4: memref<1x128xf32, #tpu.memory_space<vmem>>) attributes {dimension_semantics = [#tpu.dimension_semantics<arbitrary>], iteration_bounds = array<i64: 1>, scalar_prefetch = 0 : i64, scratch_operands = 0 : i64, tpu.core_type = #tpu.core_type<tc>, window_params = [{transform_indices = @transform_0, window_bounds = array<i64: 392, 128>}, {pipeline_mode = #tpu.pipeline_mode<synchronous>, transform_indices = @transform_1, window_bounds = array<i64: 128, 128>}, {pipeline_mode = #tpu.pipeline_mode<synchronous>, transform_indices = @transform_2, window_bounds = array<i64: 1, 128>}, {pipeline_mode = #tpu.pipeline_mode<synchronous>, transform_indices = @transform_3, window_bounds = array<i64: 1, 128>}]} {
    %c0_i32 = arith.constant 0 : i32
    %0 = arith.cmpi eq, %arg0, %c0_i32 : i32
    %1 = arith.extui %0 : i1 to i32
    %c0_i32_0 = arith.constant 0 : i32
    %2 = arith.cmpi ne, %1, %c0_i32_0 : i32
    scf.if %2 {
      %cst_14 = arith.constant 0.000000e+00 : f32
      %17 = vector.broadcast %cst_14 : f32 to vector<1x128xf32>
      %c0_15 = arith.constant 0 : index
      %c0_16 = arith.constant 0 : index
      %18 = vector.load %arg3[%c0_15, %c0_16] : memref<1x128xf32, #tpu.memory_space<vmem>>, vector<1x128xf32>
      tpu.vector_store %arg3[%c0_15, %c0_16], %17 {strides = array<i32>} : memref<1x128xf32, #tpu.memory_space<vmem>>, vector<1x128xf32>,
      %cst_17 = arith.constant 0.000000e+00 : f32
      %19 = vector.broadcast %cst_17 : f32 to vector<1x128xf32>
      %c0_18 = arith.constant 0 : index
      %c0_19 = arith.constant 0 : index
      %20 = vector.load %arg4[%c0_18, %c0_19] : memref<1x128xf32, #tpu.memory_space<vmem>>, vector<1x128xf32>
      tpu.vector_store %arg4[%c0_18, %c0_19], %19 {strides = array<i32>} : memref<1x128xf32, #tpu.memory_space<vmem>>, vector<1x128xf32>,
    } else {
    }
    %c0 = arith.constant 0 : index
    %c0_1 = arith.constant 0 : index
    %3 = vector.load %arg1[%c0, %c0_1] : memref<392x128xf32, #tpu.memory_space<vmem>>, vector<392x128xf32>
    %c0_2 = arith.constant 0 : index
    %c0_3 = arith.constant 0 : index
    %4 = vector.load %arg2[%c0_2, %c0_3] : memref<128x128xf32, #tpu.memory_space<vmem>>, vector<128x128xf32>
    %cst = arith.constant dense<0.000000e+00> : vector<392x128xf32>
    %5 = tpu.matmul %3, %4, %cst {dimension_numbers = #tpu.dot_dimension_numbers<[1], [0], [0], [1], [0, 0, 1, 1], [], []>} : vector<392x128xf32>, vector<128x128xf32>, vector<392x128xf32> -> vector<392x128xf32>
    %c0_4 = arith.constant 0 : index
    %c0_5 = arith.constant 0 : index
    %6 = vector.load %arg3[%c0_4, %c0_5] : memref<1x128xf32, #tpu.memory_space<vmem>>, vector<1x128xf32>
    %cst_6 = arith.constant dense<0.000000e+00> : vector<128xf32>
    %7 = vector.multi_reduction <add>, %5, %cst_6 [0] : vector<392x128xf32> to vector<128xf32>
    %8 = vector.shape_cast %7 : vector<128xf32> to vector<1x128xf32>
    %9 = arith.addf %6, %8 : vector<1x128xf32>
    %c0_7 = arith.constant 0 : index
    %c0_8 = arith.constant 0 : index
    %10 = vector.load %arg3[%c0_7, %c0_8] : memref<1x128xf32, #tpu.memory_space<vmem>>, vector<1x128xf32>
    tpu.vector_store %arg3[%c0_7, %c0_8], %9 {strides = array<i32>} : memref<1x128xf32, #tpu.memory_space<vmem>>, vector<1x128xf32>,
    %c0_9 = arith.constant 0 : index
    %c0_10 = arith.constant 0 : index
    %11 = vector.load %arg4[%c0_9, %c0_10] : memref<1x128xf32, #tpu.memory_space<vmem>>, vector<1x128xf32>
    %12 = arith.mulf %5, %5 : vector<392x128xf32>
    %cst_11 = arith.constant dense<0.000000e+00> : vector<128xf32>
    %13 = vector.multi_reduction <add>, %12, %cst_11 [0] : vector<392x128xf32> to vector<128xf32>
    %14 = vector.shape_cast %13 : vector<128xf32> to vector<1x128xf32>
    %15 = arith.addf %11, %14 : vector<1x128xf32>
    %c0_12 = arith.constant 0 : index
    %c0_13 = arith.constant 0 : index
    %16 = vector.load %arg4[%c0_12, %c0_13] : memref<1x128xf32, #tpu.memory_space<vmem>>, vector<1x128xf32>
    tpu.vector_store %arg4[%c0_12, %c0_13], %15 {strides = array<i32>} : memref<1x128xf32, #tpu.memory_space<vmem>>, vector<1x128xf32>,
    return
  }
  func.func @transform_0(%arg0: i32) -> (i32, i32) {
    %c0_i32 = arith.constant 0 : i32
    %c0_i32_0 = arith.constant 0 : i32
    return %arg0, %c0_i32 : i32, i32
  }
  func.func @transform_1(%arg0: i32) -> (i32, i32) {
    %c0_i32 = arith.constant 0 : i32
    %c0_i32_0 = arith.constant 0 : i32
    %c0_i32_1 = arith.constant 0 : i32
    return %c0_i32, %c0_i32_0 : i32, i32
  }
  func.func @transform_2(%arg0: i32) -> (i32, i32) {
    %c0_i32 = arith.constant 0 : i32
    %c0_i32_0 = arith.constant 0 : i32
    %c0_i32_1 = arith.constant 0 : i32
    return %c0_i32, %c0_i32_0 : i32, i32
  }
  func.func @transform_3(%arg0: i32) -> (i32, i32) {
    %c0_i32 = arith.constant 0 : i32
    %c0_i32_0 = arith.constant 0 : i32
    %c0_i32_1 = arith.constant 0 : i32
    return %c0_i32, %c0_i32_0 : i32, i32
  }
}

</mosaic_0001>

<llo_original>
// kernel: tpu_custom_call.1
$region0: #{tpu_custom_call.1}
  #allocation0 [shape = 'u32[]', space=smem, size = 0x4, offset = 0x4, fixed_abs, tag = 'smem constant byte address 0x4 - core index']
  #allocation1 [shape = 'u32[144,128]{1,0:T(1,128)}', space=vmem, size = 0x12000, scoped, tag = 'internal scratch']
  %s0 = inlined_call_operand.hbm [shape: f32[392,128], index: 0, kind: input, shape index: {}]
  %s1 = inlined_call_operand.hbm [shape: f32[128,128], index: 1, kind: input, shape index: {}]
  %s2 = inlined_call_operand.hbm [shape: f32[1,128], index: 2, kind: output, shape index: {0}]
  %s3 = inlined_call_operand.hbm [shape: f32[1,128], index: 3, kind: output, shape index: {1}]
  %4 = xla_tuple %s2, %s3
  %s5 = sld [smem:[#allocation0]]
  $region38: #{tpu_custom_call.1} parent=0
    _
  %s7 = ssub.s32 1, %s5
  %s8 = scalar_select 0, %s7, %s5
  $region1: #{tpu_custom_call.1} parent=0
    #allocation2 [shape = 'u8[200704]{0}', space=vmem, size = 0x31000, scoped, tag = 'input window, operand 0, single buffered']
    #allocation3 [shape = 's32[1]{0}', space=sflag, size = 0x4, scoped, tag = 'scoped memory for tpu_custom_call.1']
    #allocation4 [shape = 's32[1]{0}', space=sflag, size = 0x4, scoped, tag = 'scoped memory for tpu_custom_call.1']
    #allocation5 [shape = 'u8[65536]{0}', space=vmem, size = 0x10000, scoped, tag = 'input window, operand 1, single buffered']
    #allocation6 [shape = 's32[1]{0}', space=sflag, size = 0x4, scoped, tag = 'scoped memory for tpu_custom_call.1']
    #allocation7 [shape = 'u8[512]{0}', space=vmem, size = 0x400, scoped, tag = 'output window, operand 0, single buffered']
    #allocation8 [shape = 'u8[512]{0}', space=vmem, size = 0x400, scoped, tag = 'output window, operand 1, single buffered']
    #allocation9 [shape = 's32[1]{0}', space=sflag, size = 0x4, scoped, tag = 'scoped memory for tpu_custom_call.1']
    %9 = vsyncpa [#allocation3], 0
    %10 = vsyncpa [#allocation6], 0
    %11 = vsyncpa [#allocation4], 0
    %12 = vsyncpa [#allocation9], 0
    // Predicated region
    $region2: #{tpu_custom_call.1} parent=1 // pred_check
      _
    $region3: #{tpu_custom_call.1} parent=1 // pred_check_branch
      %14 = sbr.rel (0) target = $region5
    $region4: #{tpu_custom_call.1} parent=1 // pred_region
      %s16 = ssub.s32 6272, 6272
      %17 = vsyncadd [#allocation3], %s16
      %s18 = sshll.u32 [#allocation2], 4
      %s19 = int_to_ptr.vmem [resolvable:$true] %s18
      %24 = dma.hbm_to_vmem [thread:$0]  %s0, 6272, %s19, [#allocation3], 128, 128, 8
    $region5: #{tpu_custom_call.1} parent=1 // pred_fallthru
      _
    // Predicated region
    $region6: #{tpu_custom_call.1} parent=1 // pred_check
      _
    $region7: #{tpu_custom_call.1} parent=1 // pred_check_branch
      %26 = sbr.rel (0) target = $region9
    $region8: #{tpu_custom_call.1} parent=1 // pred_region
      %s28 = ssub.s32 2048, 2048
      %29 = vsyncadd [#allocation6], %s28
      %s30 = sshll.u32 [#allocation5], 4
      %s31 = int_to_ptr.vmem [resolvable:$true] %s30
      %36 = dma.hbm_to_vmem [thread:$0]  %s1, 2048, %s31, [#allocation6], 128, 128, 8
    $region9: #{tpu_custom_call.1} parent=1 // pred_fallthru
      _
    // Predicated region
    $region10: #{tpu_custom_call.1} parent=1 // pred_check
      _
    $region11: #{tpu_custom_call.1} parent=1 // pred_check_branch
      %38 = sbr.rel (0) target = $region13
    $region12: #{tpu_custom_call.1} parent=1 // pred_region
      %39 = dma.done [#allocation3], 6272
    $region13: #{tpu_custom_call.1} parent=1 // pred_fallthru
      _
    // Predicated region
    $region14: #{tpu_custom_call.1} parent=1 // pred_check
      _
    $region15: #{tpu_custom_call.1} parent=1 // pred_check_branch
      %41 = sbr.rel (0) target = $region17
    $region16: #{tpu_custom_call.1} parent=1 // pred_region
      %42 = dma.done [#allocation6], 2048
    $region17: #{tpu_custom_call.1} parent=1 // pred_fallthru
      _
    %p43 = scmp.eq.s32.totalorder 0, 0
    // Predicated region
    $region18: #{tpu_custom_call.1} parent=1 // pred_check
      %p44 = pneg %p43
    $region19: #{tpu_custom_call.1} parent=1 // pred_check_branch
      %46 = sbr.rel (%p44) target = $region21
    $region20: #{tpu_custom_call.1} parent=1 // pred_region
      %47 = vst [vmem:[#allocation7] sm:$0x1] 0.0
      %48 = vst [vmem:[#allocation8] sm:$0x1] 0.0
    $region21: #{tpu_custom_call.1} parent=1 // pred_fallthru
      _
    %v49 = vld [vmem:[#allocation2] sm:$0xff]
    %v50 = vld [vmem:[#allocation2 + $0x8] sm:$0xff]
    %v51 = vld [vmem:[#allocation2 + $0x10] sm:$0xff]
    %v52 = vld [vmem:[#allocation2 + $0x18] sm:$0xff]
    %v53 = vld [vmem:[#allocation2 + $0x20] sm:$0xff]
    %v54 = vld [vmem:[#allocation2 + $0x28] sm:$0xff]
    %v55 = vld [vmem:[#allocation2 + $0x30] sm:$0xff]
    %v56 = vld [vmem:[#allocation2 + $0x38] sm:$0xff]
    %v57 = vld [vmem:[#allocation2 + $0x40] sm:$0xff]
    %v58 = vld [vmem:[#allocation2 + $0x48] sm:$0xff]
    %v59 = vld [vmem:[#allocation2 + $0x50] sm:$0xff]
    %v60 = vld [vmem:[#allocation2 + $0x58] sm:$0xff]
    %v61 = vld [vmem:[#allocation2 + $0x60] sm:$0xff]
    %v62 = vld [vmem:[#allocation2 + $0x68] sm:$0xff]
    %v63 = vld [vmem:[#allocation2 + $0x70] sm:$0xff]
    %v64 = vld [vmem:[#allocation2 + $0x78] sm:$0xff]
    %v65 = vld [vmem:[#allocation2 + $0x80] sm:$0xff]
    %v66 = vld [vmem:[#allocation2 + $0x88] sm:$0xff]
    %v67 = vld [vmem:[#allocation2 + $0x90] sm:$0xff]
    %v68 = vld [vmem:[#allocation2 + $0x98] sm:$0xff]
    %v69 = vld [vmem:[#allocation2 + $0xa0] sm:$0xff]
    %v70 = vld [vmem:[#allocation2 + $0xa8] sm:$0xff]
    %v71 = vld [vmem:[#allocation2 + $0xb0] sm:$0xff]
    %v72 = vld [vmem:[#allocation2 + $0xb8] sm:$0xff]
    %v73 = vld [vmem:[#allocation2 + $0xc0] sm:$0xff]
    %v74 = vld [vmem:[#allocation2 + $0xc8] sm:$0xff]
    %v75 = vld [vmem:[#allocation2 + $0xd0] sm:$0xff]
    %v76 = vld [vmem:[#allocation2 + $0xd8] sm:$0xff]
    %v77 = vld [vmem:[#allocation2 + $0xe0] sm:$0xff]
    %v78 = vld [vmem:[#allocation2 + $0xe8] sm:$0xff]
    %v79 = vld [vmem:[#allocation2 + $0xf0] sm:$0xff]
    %v80 = vld [vmem:[#allocation2 + $0xf8] sm:$0xff]
    %v81 = vld [vmem:[#allocation2 + $0x100] sm:$0xff]
    %v82 = vld [vmem:[#allocation2 + $0x108] sm:$0xff]
    %v83 = vld [vmem:[#allocation2 + $0x110] sm:$0xff]
    %v84 = vld [vmem:[#allocation2 + $0x118] sm:$0xff]
    %v85 = vld [vmem:[#allocation2 + $0x120] sm:$0xff]
    %v86 = vld [vmem:[#allocation2 + $0x128] sm:$0xff]
    %v87 = vld [vmem:[#allocation2 + $0x130] sm:$0xff]
    %v88 = vld [vmem:[#allocation2 + $0x138] sm:$0xff]
    %v89 = vld [vmem:[#allocation2 + $0x140] sm:$0xff]
    %v90 = vld [vmem:[#allocation2 + $0x148] sm:$0xff]
    %v91 = vld [vmem:[#allocation2 + $0x150] sm:$0xff]
    %v92 = vld [vmem:[#allocation2 + $0x158] sm:$0xff]
    %v93 = vld [vmem:[#allocation2 + $0x160] sm:$0xff]
    %v94 = vld [vmem:[#allocation2 + $0x168] sm:$0xff]
    %v95 = vld [vmem:[#allocation2 + $0x170] sm:$0xff]
    %v96 = vld [vmem:[#allocation2 + $0x178] sm:$0xff]
    %v97 = vld [vmem:[#allocation2 + $0x180] sm:$0xff]
    %v98 = vld [vmem:[#allocation5] sm:$0xff]
    %v99 = vld [vmem:[#allocation5 + $0x8] sm:$0xff]
    %v100 = vld [vmem:[#allocation5 + $0x10] sm:$0xff]
    %v101 = vld [vmem:[#allocation5 + $0x18] sm:$0xff]
    %v102 = vld [vmem:[#allocation5 + $0x20] sm:$0xff]
    %v103 = vld [vmem:[#allocation5 + $0x28] sm:$0xff]
    %v104 = vld [vmem:[#allocation5 + $0x30] sm:$0xff]
    %v105 = vld [vmem:[#allocation5 + $0x38] sm:$0xff]
    %v106 = vld [vmem:[#allocation5 + $0x40] sm:$0xff]
    %v107 = vld [vmem:[#allocation5 + $0x48] sm:$0xff]
    %v108 = vld [vmem:[#allocation5 + $0x50] sm:$0xff]
    %v109 = vld [vmem:[#allocation5 + $0x58] sm:$0xff]
    %v110 = vld [vmem:[#allocation5 + $0x60] sm:$0xff]
    %v111 = vld [vmem:[#allocation5 + $0x68] sm:$0xff]
    %v112 = vld [vmem:[#allocation5 + $0x70] sm:$0xff]
    %v113 = vld [vmem:[#allocation5 + $0x78] sm:$0xff]
    %114 = vmatprep.subr.mxu0 0.0
    %115 = vmatpush1.msra.mxu0 %v98
    %116 = vmatprep.subr.mxu0 0.0
    %117 = vmatpush1.msra.mxu0 %v99
    %118 = vmatprep.subr.mxu0 0.0
    %119 = vmatpush1.msra.mxu0 %v100
    %120 = vmatprep.subr.mxu0 0.0
    %121 = vmatpush1.msra.mxu0 %v101
    %122 = vmatprep.subr.mxu0 0.0
    %123 = vmatpush1.msra.mxu0 %v102
    %124 = vmatprep.subr.mxu0 0.0
    %125 = vmatpush1.msra.mxu0 %v103
    %126 = vmatprep.subr.mxu0 0.0
    %127 = vmatpush1.msra.mxu0 %v104
    %128 = vmatprep.subr.mxu0 0.0
    %129 = vmatpush1.msra.mxu0 %v105
    %130 = vmatprep.subr.mxu0 0.0
    %131 = vmatpush1.msra.mxu0 %v106
    %132 = vmatprep.subr.mxu0 0.0
    %133 = vmatpush1.msra.mxu0 %v107
    %134 = vmatprep.subr.mxu0 0.0
    %135 = vmatpush1.msra.mxu0 %v108
    %136 = vmatprep.subr.mxu0 0.0
    %137 = vmatpush1.msra.mxu0 %v109
    %138 = vmatprep.subr.mxu0 0.0
    %139 = vmatpush1.msra.mxu0 %v110
    %140 = vmatprep.subr.mxu0 0.0
    %141 = vmatpush1.msra.mxu0 %v111
    %142 = vmatprep.subr.mxu0 0.0
    %143 = vmatpush1.msra.mxu0 %v112
    %144 = vmatprep.subr.mxu0 0.0
    %145 = vmatpush1.msra.mxu0 %v113
    %146 = vmatprep.subr.mxu0 0.0
    %147 = vmatpush1.msra.mxu0 0.0
    %148 = vmatprep.subr.mxu0 0.0
    %149 = vmatpush1.msra.mxu0 0.0
    %150 = vmatprep.subr.mxu0 0.0
    %151 = vmatpush1.msra.mxu0 0.0
    %152 = vmatprep.subr.mxu0 0.0
    %153 = vmatpush1.msra.mxu0 0.0
    %154 = vmatprep.subr.mxu0 0.0
    %155 = vmatpush1.msra.mxu0 0.0
    %156 = vmatprep.subr.mxu0 0.0
    %157 = vmatpush1.msra.mxu0 0.0
    %158 = vmatprep.subr.mxu0 0.0
    %159 = vmatpush1.msra.mxu0 0.0
    %160 = vmatprep.subr.mxu0 0.0
    %161 = vmatpush1.msra.mxu0 0.0
    %162 = vmatprep.subr.mxu0 0.0
    %163 = vmatpush1.msra.mxu0 0.0
    %164 = vmatprep.subr.mxu0 0.0
    %165 = vmatpush1.msra.mxu0 0.0
    %166 = vmatprep.subr.mxu0 0.0
    %167 = vmatpush1.msra.mxu0 0.0
    %168 = vmatprep.subr.mxu0 0.0
    %169 = vmatpush1.msra.mxu0 0.0
    %170 = vmatprep.subr.mxu0 0.0
    %171 = vmatpush1.msra.mxu0 0.0
    %172 = vmatprep.subr.mxu0 0.0
    %173 = vmatpush1.msra.mxu0 0.0
    %174 = vmatprep.subr.mxu0 0.0
    %175 = vmatpush1.msra.mxu0 0.0
    %176 = vmatprep.subr.mxu0 0.0
    %177 = vmatpush1.msra.mxu0 0.0
    %178 = vmatprep.mubr.f32.mxu0 0.0
    %179 = vmatmul.mubr.f32.gmra.mrb[0].mxu0 %v49
    %v180 = vpop.f32.mrb[0].mxu0
    %v181 = vadd.f32 0.0, %v180
    %v182 = vpop.f32.mrb[0].mxu0
    %183 = vmatprep.mubr.f32.mxu0 0.0
    %184 = vmatmul.mubr.f32.gmra.mrb[0].mxu0 %v50
    %v185 = vpop.f32.mrb[0].mxu0
    %v186 = vadd.f32 0.0, %v185
    %v187 = vpop.f32.mrb[0].mxu0
    %188 = vmatprep.mubr.f32.mxu0 0.0
    %189 = vmatmul.mubr.f32.gmra.mrb[0].mxu0 %v51
    %v190 = vpop.f32.mrb[0].mxu0
    %v191 = vadd.f32 0.0, %v190
    %v192 = vpop.f32.mrb[0].mxu0
    %193 = vmatprep.mubr.f32.mxu0 0.0
    %194 = vmatmul.mubr.f32.gmra.mrb[0].mxu0 %v52
    %v195 = vpop.f32.mrb[0].mxu0
    %v196 = vadd.f32 0.0, %v195
    %v197 = vpop.f32.mrb[0].mxu0
    %198 = vmatprep.mubr.f32.mxu0 0.0
    %199 = vmatmul.mubr.f32.gmra.mrb[0].mxu0 %v53
    %v200 = vpop.f32.mrb[0].mxu0
    %v201 = vadd.f32 0.0, %v200
    %v202 = vpop.f32.mrb[0].mxu0
    %203 = vmatprep.mubr.f32.mxu0 0.0
    %204 = vmatmul.mubr.f32.gmra.mrb[0].mxu0 %v54
    %v205 = vpop.f32.mrb[0].mxu0
    %v206 = vadd.f32 0.0, %v205
    %v207 = vpop.f32.mrb[0].mxu0
    %208 = vmatprep.mubr.f32.mxu0 0.0
    %209 = vmatmul.mubr.f32.gmra.mrb[0].mxu0 %v55
    %v210 = vpop.f32.mrb[0].mxu0
    %v211 = vadd.f32 0.0, %v210
    %v212 = vpop.f32.mrb[0].mxu0
    %213 = vmatprep.mubr.f32.mxu0 0.0
    %214 = vmatmul.mubr.f32.gmra.mrb[0].mxu0 %v56
    %v215 = vpop.f32.mrb[0].mxu0
    %v216 = vadd.f32 0.0, %v215
    %v217 = vpop.f32.mrb[0].mxu0
    %218 = vmatprep.mubr.f32.mxu0 0.0
    %219 = vmatmul.mubr.f32.gmra.mrb[0].mxu0 %v57
    %v220 = vpop.f32.mrb[0].mxu0
    %v221 = vadd.f32 0.0, %v220
    %v222 = vpop.f32.mrb[0].mxu0
    %223 = vmatprep.mubr.f32.mxu0 0.0
    %224 = vmatmul.mubr.f32.gmra.mrb[0].mxu0 %v58
    %v225 = vpop.f32.mrb[0].mxu0
    %v226 = vadd.f32 0.0, %v225
    %v227 = vpop.f32.mrb[0].mxu0
    %228 = vmatprep.mubr.f32.mxu0 0.0
    %229 = vmatmul.mubr.f32.gmra.mrb[0].mxu0 %v59
    %v230 = vpop.f32.mrb[0].mxu0
    %v231 = vadd.f32 0.0, %v230
    %v232 = vpop.f32.mrb[0].mxu0
    %233 = vmatprep.mubr.f32.mxu0 0.0
    %234 = vmatmul.mubr.f32.gmra.mrb[0].mxu0 %v60
    %v235 = vpop.f32.mrb[0].mxu0
    %v236 = vadd.f32 0.0, %v235
    %v237 = vpop.f32.mrb[0].mxu0
    %238 = vmatprep.mubr.f32.mxu0 0.0
    %239 = vmatmul.mubr.f32.gmra.mrb[0].mxu0 %v61
    %v240 = vpop.f32.mrb[0].mxu0
    %v241 = vadd.f32 0.0, %v240
    %v242 = vpop.f32.mrb[0].mxu0
    %243 = vmatprep.mubr.f32.mxu0 0.0
    %244 = vmatmul.mubr.f32.gmra.mrb[0].mxu0 %v62
    %v245 = vpop.f32.mrb[0].mxu0
    %v246 = vadd.f32 0.0, %v245
    %v247 = vpop.f32.mrb[0].mxu0
    %248 = vmatprep.mubr.f32.mxu0 0.0
    %249 = vmatmul.mubr.f32.gmra.mrb[0].mxu0 %v63
    %v250 = vpop.f32.mrb[0].mxu0
    %v251 = vadd.f32 0.0, %v250
    %v252 = vpop.f32.mrb[0].mxu0
    %253 = vmatprep.mubr.f32.mxu0 0.0
    %254 = vmatmul.mubr.f32.gmra.mrb[0].mxu0 %v64
    %v255 = vpop.f32.mrb[0].mxu0
    %v256 = vadd.f32 0.0, %v255
    %v257 = vpop.f32.mrb[0].mxu0
    %258 = vmatprep.mubr.f32.mxu0 0.0
    %259 = vmatmul.mubr.f32.gmra.mrb[0].mxu0 %v65
    %v260 = vpop.f32.mrb[0].mxu0
    %v261 = vadd.f32 0.0, %v260
    %v262 = vpop.f32.mrb[0].mxu0
    %263 = vmatprep.mubr.f32.mxu0 0.0
    %264 = vmatmul.mubr.f32.gmra.mrb[0].mxu0 %v66
    %v265 = vpop.f32.mrb[0].mxu0
    %v266 = vadd.f32 0.0, %v265
    %v267 = vpop.f32.mrb[0].mxu0
    %268 = vmatprep.mubr.f32.mxu0 0.0
    %269 = vmatmul.mubr.f32.gmra.mrb[0].mxu0 %v67
    %v270 = vpop.f32.mrb[0].mxu0
    %v271 = vadd.f32 0.0, %v270
    %v272 = vpop.f32.mrb[0].mxu0
    %273 = vmatprep.mubr.f32.mxu0 0.0
    %274 = vmatmul.mubr.f32.gmra.mrb[0].mxu0 %v68
    %v275 = vpop.f32.mrb[0].mxu0
    %v276 = vadd.f32 0.0, %v275
    %v277 = vpop.f32.mrb[0].mxu0
    %278 = vmatprep.mubr.f32.mxu0 0.0
    %279 = vmatmul.mubr.f32.gmra.mrb[0].mxu0 %v69
    %v280 = vpop.f32.mrb[0].mxu0
    %v281 = vadd.f32 0.0, %v280
    %v282 = vpop.f32.mrb[0].mxu0
    %283 = vmatprep.mubr.f32.mxu0 0.0
    %284 = vmatmul.mubr.f32.gmra.mrb[0].mxu0 %v70
    %v285 = vpop.f32.mrb[0].mxu0
    %v286 = vadd.f32 0.0, %v285
    %v287 = vpop.f32.mrb[0].mxu0
    %288 = vmatprep.mubr.f32.mxu0 0.0
    %289 = vmatmul.mubr.f32.gmra.mrb[0].mxu0 %v71
    %v290 = vpop.f32.mrb[0].mxu0
    %v291 = vadd.f32 0.0, %v290
    %v292 = vpop.f32.mrb[0].mxu0
    %293 = vmatprep.mubr.f32.mxu0 0.0
    %294 = vmatmul.mubr.f32.gmra.mrb[0].mxu0 %v72
    %v295 = vpop.f32.mrb[0].mxu0
    %v296 = vadd.f32 0.0, %v295
    %v297 = vpop.f32.mrb[0].mxu0
    %298 = vmatprep.mubr.f32.mxu0 0.0
    %299 = vmatmul.mubr.f32.gmra.mrb[0].mxu0 %v73
    %v300 = vpop.f32.mrb[0].mxu0
    %v301 = vadd.f32 0.0, %v300
    %v302 = vpop.f32.mrb[0].mxu0
    %303 = vmatprep.mubr.f32.mxu0 0.0
    %304 = vmatmul.mubr.f32.gmra.mrb[0].mxu0 %v74
    %v305 = vpop.f32.mrb[0].mxu0
    %v306 = vadd.f32 0.0, %v305
    %v307 = vpop.f32.mrb[0].mxu0
    %308 = vmatprep.mubr.f32.mxu0 0.0
    %309 = vmatmul.mubr.f32.gmra.mrb[0].mxu0 %v75
    %v310 = vpop.f32.mrb[0].mxu0
    %v311 = vadd.f32 0.0, %v310
    %v312 = vpop.f32.mrb[0].mxu0
    %313 = vmatprep.mubr.f32.mxu0 0.0
    %314 = vmatmul.mubr.f32.gmra.mrb[0].mxu0 %v76
    %v315 = vpop.f32.mrb[0].mxu0
    %v316 = vadd.f32 0.0, %v315
    %v317 = vpop.f32.mrb[0].mxu0
    %318 = vmatprep.mubr.f32.mxu0 0.0
    %319 = vmatmul.mubr.f32.gmra.mrb[0].mxu0 %v77
    %v320 = vpop.f32.mrb[0].mxu0
    %v321 = vadd.f32 0.0, %v320
    %v322 = vpop.f32.mrb[0].mxu0
    %323 = vmatprep.mubr.f32.mxu0 0.0
    %324 = vmatmul.mubr.f32.gmra.mrb[0].mxu0 %v78
    %v325 = vpop.f32.mrb[0].mxu0
    %v326 = vadd.f32 0.0, %v325
    %v327 = vpop.f32.mrb[0].mxu0
    %328 = vmatprep.mubr.f32.mxu0 0.0
    %329 = vmatmul.mubr.f32.gmra.mrb[0].mxu0 %v79
    %v330 = vpop.f32.mrb[0].mxu0
    %v331 = vadd.f32 0.0, %v330
    %v332 = vpop.f32.mrb[0].mxu0
    %333 = vmatprep.mubr.f32.mxu0 0.0
    %334 = vmatmul.mubr.f32.gmra.mrb[0].mxu0 %v80
    %v335 = vpop.f32.mrb[0].mxu0
    %v336 = vadd.f32 0.0, %v335
    %v337 = vpop.f32.mrb[0].mxu0
    %338 = vmatprep.mubr.f32.mxu0 0.0
    %339 = vmatmul.mubr.f32.gmra.mrb[0].mxu0 %v81
    %v340 = vpop.f32.mrb[0].mxu0
    %v341 = vadd.f32 0.0, %v340
    %v342 = vpop.f32.mrb[0].mxu0
    %343 = vmatprep.mubr.f32.mxu0 0.0
    %344 = vmatmul.mubr.f32.gmra.mrb[0].mxu0 %v82
    %v345 = vpop.f32.mrb[0].mxu0
    %v346 = vadd.f32 0.0, %v345
    %v347 = vpop.f32.mrb[0].mxu0
    %348 = vmatprep.mubr.f32.mxu0 0.0
    %349 = vmatmul.mubr.f32.gmra.mrb[0].mxu0 %v83
    %v350 = vpop.f32.mrb[0].mxu0
    %v351 = vadd.f32 0.0, %v350
    %v352 = vpop.f32.mrb[0].mxu0
    %353 = vmatprep.mubr.f32.mxu0 0.0
    %354 = vmatmul.mubr.f32.gmra.mrb[0].mxu0 %v84
    %v355 = vpop.f32.mrb[0].mxu0
    %v356 = vadd.f32 0.0, %v355
    %v357 = vpop.f32.mrb[0].mxu0
    %358 = vmatprep.mubr.f32.mxu0 0.0
    %359 = vmatmul.mubr.f32.gmra.mrb[0].mxu0 %v85
    %v360 = vpop.f32.mrb[0].mxu0
    %v361 = vadd.f32 0.0, %v360
    %v362 = vpop.f32.mrb[0].mxu0
    %363 = vmatprep.mubr.f32.mxu0 0.0
    %364 = vmatmul.mubr.f32.gmra.mrb[0].mxu0 %v86
    %v365 = vpop.f32.mrb[0].mxu0
    %v366 = vadd.f32 0.0, %v365
    %v367 = vpop.f32.mrb[0].mxu0
    %368 = vmatprep.mubr.f32.mxu0 0.0
    %369 = vmatmul.mubr.f32.gmra.mrb[0].mxu0 %v87
    %v370 = vpop.f32.mrb[0].mxu0
    %v371 = vadd.f32 0.0, %v370
    %v372 = vpop.f32.mrb[0].mxu0
    %373 = vmatprep.mubr.f32.mxu0 0.0
    %374 = vmatmul.mubr.f32.gmra.mrb[0].mxu0 %v88
    %v375 = vpop.f32.mrb[0].mxu0
    %v376 = vadd.f32 0.0, %v375
    %v377 = vpop.f32.mrb[0].mxu0
    %378 = vmatprep.mubr.f32.mxu0 0.0
    %379 = vmatmul.mubr.f32.gmra.mrb[0].mxu0 %v89
    %v380 = vpop.f32.mrb[0].mxu0
    %v381 = vadd.f32 0.0, %v380
    %v382 = vpop.f32.mrb[0].mxu0
    %383 = vmatprep.mubr.f32.mxu0 0.0
    %384 = vmatmul.mubr.f32.gmra.mrb[0].mxu0 %v90
    %v385 = vpop.f32.mrb[0].mxu0
    %v386 = vadd.f32 0.0, %v385
    %v387 = vpop.f32.mrb[0].mxu0
    %388 = vmatprep.mubr.f32.mxu0 0.0
    %389 = vmatmul.mubr.f32.gmra.mrb[0].mxu0 %v91
    %v390 = vpop.f32.mrb[0].mxu0
    %v391 = vadd.f32 0.0, %v390
    %v392 = vpop.f32.mrb[0].mxu0
    %393 = vmatprep.mubr.f32.mxu0 0.0
    %394 = vmatmul.mubr.f32.gmra.mrb[0].mxu0 %v92
    %v395 = vpop.f32.mrb[0].mxu0
    %v396 = vadd.f32 0.0, %v395
    %v397 = vpop.f32.mrb[0].mxu0
    %398 = vmatprep.mubr.f32.mxu0 0.0
    %399 = vmatmul.mubr.f32.gmra.mrb[0].mxu0 %v93
    %v400 = vpop.f32.mrb[0].mxu0
    %v401 = vadd.f32 0.0, %v400
    %v402 = vpop.f32.mrb[0].mxu0
    %403 = vmatprep.mubr.f32.mxu0 0.0
    %404 = vmatmul.mubr.f32.gmra.mrb[0].mxu0 %v94
    %v405 = vpop.f32.mrb[0].mxu0
    %v406 = vadd.f32 0.0, %v405
    %v407 = vpop.f32.mrb[0].mxu0
    %408 = vmatprep.mubr.f32.mxu0 0.0
    %409 = vmatmul.mubr.f32.gmra.mrb[0].mxu0 %v95
    %v410 = vpop.f32.mrb[0].mxu0
    %v411 = vadd.f32 0.0, %v410
    %v412 = vpop.f32.mrb[0].mxu0
    %413 = vmatprep.mubr.f32.mxu0 0.0
    %414 = vmatmul.mubr.f32.gmra.mrb[0].mxu0 %v96
    %v415 = vpop.f32.mrb[0].mxu0
    %v416 = vadd.f32 0.0, %v415
    %v417 = vpop.f32.mrb[0].mxu0
    %418 = vmatprep.mubr.f32.mxu0 0.0
    %419 = vmatmul.mubr.f32.gmra.mrb[0].mxu0 %v97
    %v420 = vpop.f32.mrb[0].mxu0
    %v421 = vadd.f32 0.0, %v420
    %v422 = vpop.f32.mrb[0].mxu0
    %423 = vdwg.mxu0
    %v424 = vld [vmem:[#allocation7] sm:$0x1]
    %v425 = vadd.f32 %v181, %v186
    %v426 = vadd.f32 %v425, %v191
    %v427 = vadd.f32 %v426, %v196
    %v428 = vadd.f32 %v427, %v201
    %v429 = vadd.f32 %v428, %v206
    %v430 = vadd.f32 %v429, %v211
    %v431 = vadd.f32 %v430, %v216
    %v432 = vadd.f32 %v431, %v221
    %v433 = vadd.f32 %v432, %v226
    %v434 = vadd.f32 %v433, %v231
    %v435 = vadd.f32 %v434, %v236
    %v436 = vadd.f32 %v435, %v241
    %v437 = vadd.f32 %v436, %v246
    %v438 = vadd.f32 %v437, %v251
    %v439 = vadd.f32 %v438, %v256
    %v440 = vadd.f32 %v439, %v261
    %v441 = vadd.f32 %v440, %v266
    %v442 = vadd.f32 %v441, %v271
    %v443 = vadd.f32 %v442, %v276
    %v444 = vadd.f32 %v443, %v281
    %v445 = vadd.f32 %v444, %v286
    %v446 = vadd.f32 %v445, %v291
    %v447 = vadd.f32 %v446, %v296
    %v448 = vadd.f32 %v447, %v301
    %v449 = vadd.f32 %v448, %v306
    %v450 = vadd.f32 %v449, %v311
    %v451 = vadd.f32 %v450, %v316
    %v452 = vadd.f32 %v451, %v321
    %v453 = vadd.f32 %v452, %v326
    %v454 = vadd.f32 %v453, %v331
    %v455 = vadd.f32 %v454, %v336
    %v456 = vadd.f32 %v455, %v341
    %v457 = vadd.f32 %v456, %v346
    %v458 = vadd.f32 %v457, %v351
    %v459 = vadd.f32 %v458, %v356
    %v460 = vadd.f32 %v459, %v361
    %v461 = vadd.f32 %v460, %v366
    %v462 = vadd.f32 %v461, %v371
    %v463 = vadd.f32 %v462, %v376
    %v464 = vadd.f32 %v463, %v381
    %v465 = vadd.f32 %v464, %v386
    %v466 = vadd.f32 %v465, %v391
    %v467 = vadd.f32 %v466, %v396
    %v468 = vadd.f32 %v467, %v401
    %v469 = vadd.f32 %v468, %v406
    %v470 = vadd.f32 %v469, %v411
    %v471 = vadd.f32 %v470, %v416
    %v472 = vadd.f32 %v471, %v421
    %v473 = vrot.slane %v472, 4
    %v474 = vadd.f32 %v472, %v473
    %v475 = vrot.slane %v474, 2
    %v476 = vadd.f32 %v474, %v475
    %v477 = vrot.slane %v476, 1
    %v478 = vadd.f32 %v476, %v477
    %v479 = vadd.f32 %v424, %v478
    %480 = vst [vmem:[#allocation7] sm:$0x1] %v479
    %v481 = vld [vmem:[#allocation8] sm:$0x1]
    %v482 = vmul.f32 %v181, %v181
    %v483 = vmul.f32 %v186, %v186
    %v484 = vmul.f32 %v191, %v191
    %v485 = vmul.f32 %v196, %v196
    %v486 = vmul.f32 %v201, %v201
    %v487 = vmul.f32 %v206, %v206
    %v488 = vmul.f32 %v211, %v211
    %v489 = vmul.f32 %v216, %v216
    %v490 = vmul.f32 %v221, %v221
    %v491 = vmul.f32 %v226, %v226
    %v492 = vmul.f32 %v231, %v231
    %v493 = vmul.f32 %v236, %v236
    %v494 = vmul.f32 %v241, %v241
    %v495 = vmul.f32 %v246, %v246
    %v496 = vmul.f32 %v251, %v251
    %v497 = vmul.f32 %v256, %v256
    %v498 = vmul.f32 %v261, %v261
    %v499 = vmul.f32 %v266, %v266
    %v500 = vmul.f32 %v271, %v271
    %v501 = vmul.f32 %v276, %v276
    %v502 = vmul.f32 %v281, %v281
    %v503 = vmul.f32 %v286, %v286
    %v504 = vmul.f32 %v291, %v291
    %v505 = vmul.f32 %v296, %v296
    %v506 = vmul.f32 %v301, %v301
    %v507 = vmul.f32 %v306, %v306
    %v508 = vmul.f32 %v311, %v311
    %v509 = vmul.f32 %v316, %v316
    %v510 = vmul.f32 %v321, %v321
    %v511 = vmul.f32 %v326, %v326
    %v512 = vmul.f32 %v331, %v331
    %v513 = vmul.f32 %v336, %v336
    %v514 = vmul.f32 %v341, %v341
    %v515 = vmul.f32 %v346, %v346
    %v516 = vmul.f32 %v351, %v351
    %v517 = vmul.f32 %v356, %v356
    %v518 = vmul.f32 %v361, %v361
    %v519 = vmul.f32 %v366, %v366
    %v520 = vmul.f32 %v371, %v371
    %v521 = vmul.f32 %v376, %v376
    %v522 = vmul.f32 %v381, %v381
    %v523 = vmul.f32 %v386, %v386
    %v524 = vmul.f32 %v391, %v391
    %v525 = vmul.f32 %v396, %v396
    %v526 = vmul.f32 %v401, %v401
    %v527 = vmul.f32 %v406, %v406
    %v528 = vmul.f32 %v411, %v411
    %v529 = vmul.f32 %v416, %v416
    %v530 = vmul.f32 %v421, %v421
    %v531 = vadd.f32 %v482, %v483
    %v532 = vadd.f32 %v531, %v484
    %v533 = vadd.f32 %v532, %v485
    %v534 = vadd.f32 %v533, %v486
    %v535 = vadd.f32 %v534, %v487
    %v536 = vadd.f32 %v535, %v488
    %v537 = vadd.f32 %v536, %v489
    %v538 = vadd.f32 %v537, %v490
    %v539 = vadd.f32 %v538, %v491
    %v540 = vadd.f32 %v539, %v492
    %v541 = vadd.f32 %v540, %v493
    %v542 = vadd.f32 %v541, %v494
    %v543 = vadd.f32 %v542, %v495
    %v544 = vadd.f32 %v543, %v496
    %v545 = vadd.f32 %v544, %v497
    %v546 = vadd.f32 %v545, %v498
    %v547 = vadd.f32 %v546, %v499
    %v548 = vadd.f32 %v547, %v500
    %v549 = vadd.f32 %v548, %v501
    %v550 = vadd.f32 %v549, %v502
    %v551 = vadd.f32 %v550, %v503
    %v552 = vadd.f32 %v551, %v504
    %v553 = vadd.f32 %v552, %v505
    %v554 = vadd.f32 %v553, %v506
    %v555 = vadd.f32 %v554, %v507
    %v556 = vadd.f32 %v555, %v508
    %v557 = vadd.f32 %v556, %v509
    %v558 = vadd.f32 %v557, %v510
    %v559 = vadd.f32 %v558, %v511
    %v560 = vadd.f32 %v559, %v512
    %v561 = vadd.f32 %v560, %v513
    %v562 = vadd.f32 %v561, %v514
    %v563 = vadd.f32 %v562, %v515
    %v564 = vadd.f32 %v563, %v516
    %v565 = vadd.f32 %v564, %v517
    %v566 = vadd.f32 %v565, %v518
    %v567 = vadd.f32 %v566, %v519
    %v568 = vadd.f32 %v567, %v520
    %v569 = vadd.f32 %v568, %v521
    %v570 = vadd.f32 %v569, %v522
    %v571 = vadd.f32 %v570, %v523
    %v572 = vadd.f32 %v571, %v524
    %v573 = vadd.f32 %v572, %v525
    %v574 = vadd.f32 %v573, %v526
    %v575 = vadd.f32 %v574, %v527
    %v576 = vadd.f32 %v575, %v528
    %v577 = vadd.f32 %v576, %v529
    %v578 = vadd.f32 %v577, %v530
    %v579 = vrot.slane %v578, 4
    %v580 = vadd.f32 %v578, %v579
    %v581 = vrot.slane %v580, 2
    %v582 = vadd.f32 %v580, %v581
    %v583 = vrot.slane %v582, 1
    %v584 = vadd.f32 %v582, %v583
    %v585 = vadd.f32 %v481, %v584
    %586 = vst [vmem:[#allocation8] sm:$0x1] %v585
    // Predicated region
    $region22: #{tpu_custom_call.1} parent=1 // pred_check
      _
    $region23: #{tpu_custom_call.1} parent=1 // pred_check_branch
      %588 = sbr.rel (0) target = $region25
    $region24: #{tpu_custom_call.1} parent=1 // pred_region
      %s590 = ssub.s32 16, 16
      %591 = vsyncadd [#allocation4], %s590
      %s593 = sshll.u32 [#allocation7], 4
      %s594 = int_to_ptr.vmem [resolvable:$true] %s593
      %596 = dma.vmem_to_hbm [thread:$0]  %s594, 16, %s2, [#allocation4]
    $region25: #{tpu_custom_call.1} parent=1 // pred_fallthru
      _
    // Predicated region
    $region26: #{tpu_custom_call.1} parent=1 // pred_check
      _
    $region27: #{tpu_custom_call.1} parent=1 // pred_check_branch
      %598 = sbr.rel (0) target = $region29
    $region28: #{tpu_custom_call.1} parent=1 // pred_region
      %s600 = ssub.s32 16, 16
      %601 = vsyncadd [#allocation9], %s600
      %s603 = sshll.u32 [#allocation8], 4
      %s604 = int_to_ptr.vmem [resolvable:$true] %s603
      %606 = dma.vmem_to_hbm [thread:$0]  %s604, 16, %s3, [#allocation9]
    $region29: #{tpu_custom_call.1} parent=1 // pred_fallthru
      _
    // Predicated region
    $region30: #{tpu_custom_call.1} parent=1 // pred_check
      _
    $region31: #{tpu_custom_call.1} parent=1 // pred_check_branch
      %608 = sbr.rel (0) target = $region33
    $region32: #{tpu_custom_call.1} parent=1 // pred_region
      %609 = dma.done [#allocation4], 16
    $region33: #{tpu_custom_call.1} parent=1 // pred_fallthru
      _
    // Predicated region
    $region34: #{tpu_custom_call.1} parent=1 // pred_check
      _
    $region35: #{tpu_custom_call.1} parent=1 // pred_check_branch
      %611 = sbr.rel (0) target = $region37
    $region36: #{tpu_custom_call.1} parent=1 // pred_region
      %612 = dma.done [#allocation9], 16
    $region37: #{tpu_custom_call.1} parent=1 // pred_fallthru
      _
    %613 = vsyncpa [#allocation3], 1
    %614 = vsyncpa [#allocation6], 1
    %615 = vsyncpa [#allocation4], 1
    %616 = vsyncpa [#allocation9], 1

</llo_original>
